<compile_context>
chip_gen: v6e
topology: v6e:2x2x1
jax: 0.10.0
libtpu: 0.0.40
codegen_flags: <defaults>
</compile_context>

<pallas_src>
import math
from functools import partial
from itertools import combinations

import jax
import jax.numpy as jnp
from jax import lax
from jax.experimental import pallas as pl
from jax.experimental.pallas import tpu as pltpu


_RESIDENT_STACK_BYTES = 4 * 1024 * 1024  # keep stack resident below this size


def _vmem_limit_bytes():
    """Generation-aware scoped-VMEM limit (v7x has 64 MiB/TC, v5e/v6e 128 MiB)."""
    try:
        cap = int(pltpu.get_tpu_info().vmem_capacity_bytes)
    except Exception:
        cap = 64 * 1024 * 1024           # assume the tightest generation (v7x)
    if cap <= 64 * 1024 * 1024:
        return 42 * 1024 * 1024          # ~65% of v7x physical VMEM
    return 96 * 1024 * 1024              # v5e / v6e


def _row_tile(n, max_tile=512):
    """Largest multiple-of-8 divisor of n not exceeding max_tile (else full n)."""
    if n <= max_tile:
        return n
    for rt in range(max_tile, 7, -8):
        if n % rt == 0:
            return rt
    return n


# ---------------------------------------------------------------------------
# Kernel 1: per-modality L2 normalization with 1/tau folded in (done once per
# modality, row-tiled, output already in the matmul dtype).
# ---------------------------------------------------------------------------
def _normalize_kernel(x_ref, o_ref, *, scale):
    x = x_ref[...].astype(jnp.float32)            # [1, rt, D]
    norm_sq = jnp.sum(x * x, axis=-1, keepdims=True)
    # F.normalize clamps the norm with eps=1e-12 -> clamp norm^2 with 1e-24.
    # `scale` = sqrt(1/tau): the product of two pre-scaled operands carries the
    # full 1/tau, so no post-matmul scaling is needed in the pair kernel.
    o_ref[...] = (x * (lax.rsqrt(jnp.maximum(norm_sq, 1e-24)) * scale)).astype(o_ref.dtype)


def _normalize_all(stacked, *, inv_tau, out_dtype):
    n_mod, n, d = stacked.shape
    rt = _row_tile(n)
    kernel = partial(_normalize_kernel, scale=float(math.sqrt(inv_tau)))
    return pl.pallas_call(
        kernel,
        out_shape=jax.ShapeDtypeStruct((n_mod, n, d), out_dtype),
        grid=(n_mod, n // rt),
        in_specs=[pl.BlockSpec((1, rt, d), lambda m, r: (m, r, 0))],
        out_specs=pl.BlockSpec((1, rt, d), lambda m, r: (m, r, 0)),
        compiler_params=pltpu.CompilerParams(
            dimension_semantics=("parallel", "parallel")),
    )(stacked)


# ---------------------------------------------------------------------------
# Kernel 2: InfoNCE for one modality pair per grid step.
# ---------------------------------------------------------------------------
def _infonce_body(a, b, loss_ref, acc_ref):
    """a, b: [N, D] L2-normalized operands pre-scaled by sqrt(1/tau)."""
    n = a.shape[0]
    f32 = jnp.float32
    contract = (((1,), (1,)), ((), ()))            # contract the feature axis

    # tau is folded into the operands -> these ARE the logits (f32 MXU accum).
    ab = lax.dot_general(a, b, contract, preferred_element_type=f32)   # [N, N]
    aa = lax.dot_general(a, a, contract, preferred_element_type=f32)
    bb = lax.dot_general(b, b, contract, preferred_element_type=f32)

    row = lax.broadcasted_iota(jnp.int32, (n, n), 0)
    col = lax.broadcasted_iota(jnp.int32, (n, n), 1)
    diag = row == col

    # Self-similarity diagonals masked with a single select each (no dense
    # additive mask is materialized).
    aa = jnp.where(diag, -1e9, aa)
    bb = jnp.where(diag, -1e9, bb)

    # Positive logit <a_i, b_i> (includes 1/tau through the operand pre-scale);
    # f32 accumulation even when the operands are bf16.
    pos = jnp.sum(a.astype(f32) * b.astype(f32), axis=-1, keepdims=True)  # [N,1]

    # ---- direction a: CE over the virtual concat [ab | aa] (row-wise LSE) ----
    neg_max_a = jnp.maximum(
        jnp.max(jnp.where(diag, -jnp.inf, ab), axis=-1, keepdims=True),
        jnp.max(aa, axis=-1, keepdims=True))
    m_a = jnp.maximum(neg_max_a, pos)              # stable LSE pivot
    sum_a = (jnp.sum(jnp.exp(ab - m_a), axis=-1, keepdims=True)
             + jnp.sum(jnp.exp(aa - m_a), axis=-1, keepdims=True))
    ce_a = jnp.mean(m_a + jnp.log(sum_a) - pos)

    # ssl accuracy: positive beats every negative (reuses neg_max_a; ties are
    # measure zero with float data).
    acc = 100.0 * jnp.mean((pos > neg_max_a).astype(f32))

    # ---- direction b: CE over [ba | bb], computed WITHOUT materializing ba ---
    # ba == ab.T, so direction-b row stats are column reductions over ab; bb is
    # symmetric (with a symmetric mask) so its row stats equal its column stats
    # -> everything stays in [1, N] lane layout; only `pos` is re-laid-out.
    pos_row = pos.reshape(1, n)
    m_b = jnp.maximum(
        jnp.maximum(jnp.max(ab, axis=0, keepdims=True),
                    jnp.max(bb, axis=0, keepdims=True)),
        pos_row)
    sum_b = (jnp.sum(jnp.exp(ab - m_b), axis=0, keepdims=True)
             + jnp.sum(jnp.exp(bb - m_b), axis=0, keepdims=True))
    ce_b = jnp.mean(m_b + jnp.log(sum_b) - pos_row)

    loss = 0.5 * (ce_a + ce_b)

    # Lane-dense scalar writeback (full unmasked (8,128) tile per pair).
    loss_ref[...] = jnp.full(loss_ref.shape, loss, dtype=jnp.float32)
    acc_ref[...] = jnp.full(acc_ref.shape, acc, dtype=jnp.float32)


def _pair_kernel_resident(i1_ref, i2_ref, x_ref, loss_ref, acc_ref):
    # Whole normalized stack is resident in VMEM (constant block index);
    # select the two modalities dynamically from the prefetched pair tables.
    p = pl.program_id(0)
    a = x_ref[i1_ref[p]]                           # [N, D]
    b = x_ref[i2_ref[p]]
    _infonce_body(a, b, loss_ref, acc_ref)


def _pair_kernel_windowed(i1_ref, i2_ref, a_ref, b_ref, loss_ref, acc_ref):
    del i1_ref, i2_ref                             # used only inside index_maps
    _infonce_body(a_ref[0], b_ref[0], loss_ref, acc_ref)


# ---------------------------------------------------------------------------
# Wrapper: CMCLoss.forward
# ---------------------------------------------------------------------------
def cmc_loss(inputs, temperature=0.1, matmul_dtype=jnp.bfloat16):
    """CMCLoss.forward: average InfoNCE over all modality pairs.

    matmul_dtype=jnp.bfloat16 is the production default (2-4x MXU throughput,
    half the operand DMA/VMEM); pass jnp.float32 for bit-tight parity with the
    f32 PyTorch reference.
    """
    n_mod = len(inputs)
    pairs = list(combinations(range(n_mod), 2))
    n_pairs = len(pairs)

    stacked = jnp.stack(inputs, axis=0).astype(jnp.float32)      # [n_mod, N, D]
    _, n, d = stacked.shape

    # Each modality is normalized exactly once; 1/tau folded in; stored in the
    # matmul dtype so the pair kernel never re-casts its operands.
    normalized = _normalize_all(stacked, inv_tau=1.0 / temperature,
                                out_dtype=matmul_dtype)

    i1 = jnp.asarray([p[0] for p in pairs], dtype=jnp.int32)
    i2 = jnp.asarray([p[1] for p in pairs], dtype=jnp.int32)

    out_shapes = (jax.ShapeDtypeStruct((n_pairs, 8, 128), jnp.float32),
                  jax.ShapeDtypeStruct((n_pairs, 8, 128), jnp.float32))
    out_specs = (pl.BlockSpec((1, 8, 128), lambda p, i1_r, i2_r: (p, 0, 0)),
                 pl.BlockSpec((1, 8, 128), lambda p, i1_r, i2_r: (p, 0, 0)))
    cparams = pltpu.CompilerParams(
        dimension_semantics=("parallel",),         # v7x: split pairs across TCs
        vmem_limit_bytes=_vmem_limit_bytes())

    stack_bytes = n_mod * n * d * jnp.dtype(matmul_dtype).itemsize
    if stack_bytes <= _RESIDENT_STACK_BYTES:
        # Small stack: DMA it once (constant block index keeps it resident
        # across all pairs) and pick the modalities inside the kernel body.
        loss_tiles, acc_tiles = pl.pallas_call(
            _pair_kernel_resident,
            out_shape=out_shapes,
            grid_spec=pltpu.PrefetchScalarGridSpec(
                num_scalar_prefetch=2,
                grid=(n_pairs,),
                in_specs=[pl.BlockSpec((n_mod, n, d),
                                       lambda p, i1_r, i2_r: (0, 0, 0))],
                out_specs=out_specs),
            compiler_params=cparams,
        )(i1, i2, normalized)
    else:
        # Large stack: window the two modality blocks per pair via the
        # scalar-prefetched pair-index tables.
        loss_tiles, acc_tiles = pl.pallas_call(
            _pair_kernel_windowed,
            out_shape=out_shapes,
            grid_spec=pltpu.PrefetchScalarGridSpec(
                num_scalar_prefetch=2,
                grid=(n_pairs,),
                in_specs=[pl.BlockSpec((1, n, d),
                                       lambda p, i1_r, i2_r: (i1_r[p], 0, 0)),
                          pl.BlockSpec((1, n, d),
                                       lambda p, i1_r, i2_r: (i2_r[p], 0, 0))],
                out_specs=out_specs),
            compiler_params=cparams,
        )(i1, i2, normalized, normalized)

    loss_pairs = loss_tiles[:, 0, 0]
    acc_pairs = acc_tiles[:, 0, 0]

    out = {"loss": jnp.sum(loss_pairs) / math.comb(n_mod, 2)}
    for idx, (a_i, b_i) in enumerate(pairs):
        out[f"ssl_acc_{a_i}_{b_i}"] = acc_pairs[idx]
    return out


# ---------------------------------------------------------------------------
# Pure-JAX reference (mirrors the PyTorch SLIP InfoNCE) for correctness check.
# ---------------------------------------------------------------------------
def _infonce_ref(z1, z2, temperature=0.1):
    a = z1 / jnp.linalg.norm(z1, axis=-1, keepdims=True)
    b = z2 / jnp.linalg.norm(z2, axis=-1, keepdims=True)
    n = a.shape[0]
    tau = temperature
    mask = jnp.eye(n, dtype=jnp.float32) * 1e9
    ab = a @ b.T / tau
    ba = b @ a.T / tau
    aa = a @ a.T / tau - mask
    bb = b @ b.T / tau - mask
    labels = jnp.arange(n)

    def ce(logits):
        logp = jax.nn.log_softmax(logits, axis=-1)
        return -jnp.mean(logp[jnp.arange(n), labels])

    cat_a = jnp.concatenate([ab, aa], axis=1)
    cat_b = jnp.concatenate([ba, bb], axis=1)
    loss = 0.5 * (ce(cat_a) + ce(cat_b))
    acc = 100.0 * jnp.mean((jnp.argmax(cat_a, axis=-1) == labels).astype(jnp.float32))
    return loss, acc


def cmc_loss_ref(inputs, temperature=0.1):
    out = {"loss": jnp.float32(0.0)}
    n = len(inputs)
    for i1, i2 in combinations(range(n), 2):
        loss, acc = _infonce_ref(inputs[i1], inputs[i2], temperature)
        out["loss"] = out["loss"] + loss
        out[f"ssl_acc_{i1}_{i2}"] = acc
    out["loss"] = out["loss"] / math.comb(n, 2)
    return out


if __name__ == "__main__":
    key = jax.random.PRNGKey(0)
    n_modalities, batch, dim = 3, 8, 32
    keys = jax.random.split(key, n_modalities)
    # CMCLoss has no learnable parameters (only temperature); inputs are the
    # per-modality embeddings.
    inputs = [jax.random.normal(k, (batch, dim), dtype=jnp.float32) for k in keys]

    ref = cmc_loss_ref(inputs, temperature=0.1)

    # f32 MXU path: strict parity with the (f32) PyTorch-style reference.
    out_f32 = jax.block_until_ready(
        cmc_loss(inputs, temperature=0.1, matmul_dtype=jnp.float32))
    assert abs(float(out_f32["loss"]) - float(ref["loss"])) < 1e-3, (
        out_f32["loss"], ref["loss"])
    for k in ref:
        if k.startswith("ssl_acc"):
            assert abs(float(out_f32[k]) - float(ref[k])) < 1e-3, (
                k, out_f32[k], ref[k])

    # bf16 MXU path (production default): 1/tau amplifies bf16 rounding on the
    # logits, so only a loose loss tolerance is asserted.
    out_bf16 = jax.block_until_ready(
        cmc_loss(inputs, temperature=0.1, matmul_dtype=jnp.bfloat16))
    assert abs(float(out_bf16["loss"]) - float(ref["loss"])) < 0.2, (
        out_bf16["loss"], ref["loss"])

    print("KERNEL_OK")
</pallas_src>

<mosaic_0001>
module attributes {stable_mosaic.version = 11 : i64} {
  func.func @_normalize_kernel(%arg0: i32, %arg1: i32, %arg2: memref<1x8x32xf32, #tpu.memory_space<vmem>>, %arg3: memref<1x8x32xf32, #tpu.memory_space<vmem>>) attributes {dimension_semantics = [#tpu.dimension_semantics<parallel>, #tpu.dimension_semantics<parallel>], iteration_bounds = array<i64: 3, 1>, scalar_prefetch = 0 : i64, scratch_operands = 0 : i64, tpu.core_type = #tpu.core_type<tc>, window_params = [{transform_indices = @transform_0, window_bounds = array<i64: 1, 8, 32>}, {transform_indices = @transform_1, window_bounds = array<i64: 1, 8, 32>}]} {
    %c0 = arith.constant 0 : index
    %c0_0 = arith.constant 0 : index
    %c0_1 = arith.constant 0 : index
    %0 = vector.load %arg2[%c0, %c0_0, %c0_1] : memref<1x8x32xf32, #tpu.memory_space<vmem>>, vector<1x8x32xf32>
    %1 = arith.mulf %0, %0 : vector<1x8x32xf32>
    %cst = arith.constant dense<0.000000e+00> : vector<1x8xf32>
    %2 = vector.multi_reduction <add>, %1, %cst [2] : vector<1x8x32xf32> to vector<1x8xf32>
    %3 = vector.shape_cast %2 : vector<1x8xf32> to vector<1x8x1xf32>
    %cst_2 = arith.constant 1.000000e-24 : f32
    %4 = vector.broadcast %cst_2 : f32 to vector<1x8x1xf32>
    %5 = arith.maximumf %3, %4 : vector<1x8x1xf32>
    %6 = math.rsqrt %5 : vector<1x8x1xf32>
    %cst_3 = arith.constant 3.1622777 : f32
    %7 = vector.broadcast %cst_3 : f32 to vector<1x8x1xf32>
    %8 = arith.mulf %6, %7 : vector<1x8x1xf32>
    %9 = vector.broadcast %8 : vector<1x8x1xf32> to vector<1x8x32xf32>
    %10 = arith.mulf %0, %9 : vector<1x8x32xf32>
    %c0_4 = arith.constant 0 : index
    %c0_5 = arith.constant 0 : index
    %c0_6 = arith.constant 0 : index
    %11 = vector.load %arg3[%c0_4, %c0_5, %c0_6] : memref<1x8x32xf32, #tpu.memory_space<vmem>>, vector<1x8x32xf32>
    tpu.vector_store %arg3[%c0_4, %c0_5, %c0_6], %10 {strides = array<i32>} : memref<1x8x32xf32, #tpu.memory_space<vmem>>, vector<1x8x32xf32>,
    return
  }
  func.func @transform_0(%arg0: i32, %arg1: i32) -> (i32, i32, i32) {
    %c0_i32 = arith.constant 0 : i32
    %c0_i32_0 = arith.constant 0 : i32
    return %arg0, %arg1, %c0_i32 : i32, i32, i32
  }
  func.func @transform_1(%arg0: i32, %arg1: i32) -> (i32, i32, i32) {
    %c0_i32 = arith.constant 0 : i32
    %c0_i32_0 = arith.constant 0 : i32
    return %arg0, %arg1, %c0_i32 : i32, i32, i32
  }
}

</mosaic_0001>

<llo_original>
// kernel: tpu_custom_call.1
$region0: #{tpu_custom_call.1}
  #allocation0 [shape = 'u32[]', space=smem, size = 0x4, offset = 0x4, fixed_abs, tag = 'smem constant byte address 0x4 - core index']
  #allocation1 [shape = 'u32[144,128]{1,0:T(1,128)}', space=vmem, size = 0x12000, scoped, tag = 'internal scratch']
  %s0 = inlined_call_operand.hbm [shape: f32[3,8,32], index: 0, kind: input, shape index: {}]
  %s1 = inlined_call_operand.hbm [shape: f32[3,8,32], index: 1, kind: output, shape index: {}]
  %s2 = sld [smem:[#allocation0]]
  $region41: #{tpu_custom_call.1} parent=0
    _
  %s4 = ssub.s32 1, %s2
  %s5 = scalar_select 0, %s4, %s2
  $region1: #{tpu_custom_call.1} parent=0
    #allocation2 [shape = 'u8[8192]{0}', space=vmem, size = 0x2000, scoped, tag = 'input window, operand 0']
    #allocation3 [shape = 's32[2]{0}', space=sflag, size = 0x8, scoped, tag = 'scoped memory for tpu_custom_call.1']
    #allocation4 [shape = 's32[2]{0}', space=sflag, size = 0x8, scoped, tag = 'scoped memory for tpu_custom_call.1']
    #allocation5 [shape = 'u8[8192]{0}', space=vmem, size = 0x2000, scoped, tag = 'output window, operand 0']
    %6 = vsyncpa [#allocation3], 0
    %s7 = scalar_lea.sflag [#allocation3], 1
    %8 = vsyncpa %s7, 0
    %9 = vsyncpa [#allocation4], 0
    %s10 = scalar_lea.sflag [#allocation4], 1
    %11 = vsyncpa %s10, 0
    loop: start=0, step=1, limit=5
    $region2: #{tpu_custom_call.1} parent=1 // loop_pre_header
      _
    $region3: #{tpu_custom_call.1} parent=1 // loop_header
      %s13 = sphi 0, %s17
      %p14 = scmp.ge.s32.totalorder %s13, 5
      %s20 = sphi 0, %s32
      %s21 = sphi 0, %s28
      %s22 = sphi 0, %s20
      %s23 = sphi 0, %s21
      %s24 = sphi 0, %s22
      %s25 = sphi 0, %s23
      %s37 = sphi 0, %s39
      %s40 = sphi 0, %s37
      %s41 = sphi 0, %s40
      %s57 = sphi 0, %s41
      %s65 = sphi 0, %s67
      %s68 = sphi 0, %s65
      %s69 = sphi 0, %s68
      %s85 = sphi 0, %s69
    $region4: #{tpu_custom_call.1} parent=1 // loop_header_branch
      %16 = sbr.rel (%p14) target = $region8
    $region5: #{tpu_custom_call.1} parent=1 // loop_body
      %s18 = ssub.s32 %s13, 1
      %s19 = ssub.s32 %s13, 2
      %s26 = sadd.s32 1, %s21
      %p27 = scmp.ge.s32.totalorder %s26, 1
      %s28 = scalar_select %p27, 0, %s26
      %s29 = sadd.s32 1, %s20
      %s30 = scalar_select %p27, %s29, %s20
      %p31 = scmp.ge.s32.totalorder %s30, 3
      %s32 = scalar_select %p31, 0, %s30
      %s33 = ssub.s32 %s20, %s32
      %s34 = ssub.s32 %s21, %s28
      %s35 = sor.u32 %s33, %s34
      %p36 = scmp.eq.s32.totalorder %s35, 0
      %s38 = sadd.s32 %s37, 1
      %s39 = scalar_select %p36, %s37, %s38
      %p42 = pneg %p36
      %p43 = scmp.eq.s32.totalorder %s13, 2
      %p44 = por %p42, %p43
      %p45 = scmp.ne.s32.totalorder %s37, %s40
      %p46 = scmp.eq.s32.totalorder %s13, 0
      %p47 = por %p45, %p46
      %p48 = scmp.ne.s32.totalorder %s37, %s40
      %p49 = scmp.eq.s32.totalorder %s18, 2
      %p50 = por %p48, %p49
      %p51 = scmp.ne.s32.totalorder %s40, %s41
      %p52 = scmp.eq.s32.totalorder %s18, 0
      %p53 = por %p51, %p52
      %p54 = scmp.ne.s32.totalorder %s40, %s41
      %p55 = scmp.eq.s32.totalorder %s19, 2
      %p56 = por %p54, %p55
      %p58 = scmp.ne.s32.totalorder %s41, %s57
      %p59 = scmp.eq.s32.totalorder %s19, 0
      %p60 = por %p58, %p59
      %s61 = ssub.s32 %s20, %s32
      %s62 = ssub.s32 %s21, %s28
      %s63 = sor.u32 %s61, %s62
      %p64 = scmp.eq.s32.totalorder %s63, 0
      %s66 = sadd.s32 %s65, 1
      %s67 = scalar_select %p64, %s65, %s66
      %p70 = pneg %p64
      %p71 = scmp.eq.s32.totalorder %s13, 2
      %p72 = por %p70, %p71
      %p73 = scmp.ne.s32.totalorder %s65, %s68
      %p74 = scmp.eq.s32.totalorder %s13, 0
      %p75 = por %p73, %p74
      %p76 = scmp.ne.s32.totalorder %s65, %s68
      %p77 = scmp.eq.s32.totalorder %s18, 2
      %p78 = por %p76, %p77
      %p79 = scmp.ne.s32.totalorder %s68, %s69
      %p80 = scmp.eq.s32.totalorder %s18, 0
      %p81 = por %p79, %p80
      %p82 = scmp.ne.s32.totalorder %s68, %s69
      %p83 = scmp.eq.s32.totalorder %s19, 2
      %p84 = por %p82, %p83
      %p86 = scmp.ne.s32.totalorder %s69, %s85
      %p87 = scmp.eq.s32.totalorder %s19, 0
      %p88 = por %p86, %p87
      %p89 = scmp.le.s32.totalorder 1, %s13
      %p90 = scmp.lt.s32.totalorder %s13, 4
      %p91 = pnand %p89, %p90
      %p92 = pneg %p91
      // Predicated region
      $region9: #{tpu_custom_call.1} parent=5 // pred_check
        _
      $region10: #{tpu_custom_call.1} parent=5 // pred_check_branch
        %94 = sbr.rel (%p91) target = $region12
      $region11: #{tpu_custom_call.1} parent=5 // pred_region
        %s95 = ssub.s32 %s13, 1
      $region12: #{tpu_custom_call.1} parent=5 // pred_fallthru
        _
      %p96 = scmp.lt.s32.totalorder %s13, 3
      // Predicated region
      $region13: #{tpu_custom_call.1} parent=5 // pred_check
        %p97 = pneg %p96
      $region14: #{tpu_custom_call.1} parent=5 // pred_check_branch
        %99 = sbr.rel (%p97) target = $region16
      $region15: #{tpu_custom_call.1} parent=5 // pred_region
        // Predicated region
        $region17: #{tpu_custom_call.1} parent=15 // pred_check
          %p100 = pneg %p47
        $region18: #{tpu_custom_call.1} parent=15 // pred_check_branch
          %102 = sbr.rel (%p100) target = $region20
        $region19: #{tpu_custom_call.1} parent=15 // pred_region
          %s103 = sand.u32 %s37, 1
          %s104 = scalar_lea.sflag [#allocation3], %s103
          %s105 = sand.u32 %s37, 1
          %s106 = smul.addr %s105, 8
          %s107 = scalar_lea.vmem [#allocation2], %s106
          %s109 = ssub.s32 128, 128
          %110 = vsyncadd %s104, %s109
          %s111 = sadd.s32 %s21, %s20
          %s112 = smul.addr %s111, 128
          %s113 = scalar_lea.hbm %s0, %s112
          %s115 = sshll.u32 %s107, 4
          %s116 = int_to_ptr.vmem [resolvable:$true] %s115
          %118 = dma.hbm_to_vmem [thread:$0]  %s113, 128, %s116, %s104
        $region20: #{tpu_custom_call.1} parent=15 // pred_fallthru
          _
      $region16: #{tpu_custom_call.1} parent=5 // pred_fallthru
        _
      %p119 = scmp.le.s32.totalorder 1, %s13
      %p120 = scmp.lt.s32.totalorder %s13, 4
      %p121 = pnand %p119, %p120
      %p122 = pneg %p121
      // Predicated region
      $region21: #{tpu_custom_call.1} parent=5 // pred_check
        _
      $region22: #{tpu_custom_call.1} parent=5 // pred_check_branch
        %124 = sbr.rel (%p121) target = $region24
      $region23: #{tpu_custom_call.1} parent=5 // pred_region
        %s125 = ssub.s32 %s13, 1
        %s126 = sand.u32 %s40, 1
        %s127 = scalar_lea.sflag [#allocation3], %s126
        %s128 = sand.u32 %s40, 1
        %s129 = smul.addr %s128, 8
        %s130 = scalar_lea.vmem [#allocation2], %s129
        // Predicated region
        $region25: #{tpu_custom_call.1} parent=23 // pred_check
          %p131 = pneg %p53
        $region26: #{tpu_custom_call.1} parent=23 // pred_check_branch
          %133 = sbr.rel (%p131) target = $region28
        $region27: #{tpu_custom_call.1} parent=23 // pred_region
          %134 = dma.done %s127, 128
        $region28: #{tpu_custom_call.1} parent=23 // pred_fallthru
          _
        %s135 = sand.u32 %s40, 1
        %s136 = scalar_lea.sflag [#allocation3], %s135
        %s137 = sand.u32 %s40, 1
        %s138 = smul.addr %s137, 8
        %s139 = scalar_lea.vmem [#allocation2], %s138
        %p140 = pneg %p53
        %p141 = pneg %p50
        %p142 = pneg %p81
        %p143 = pneg %p78
        %s144 = sand.u32 %s68, 1
        %s145 = scalar_lea.sflag [#allocation4], %s144
        %s146 = sand.u32 %s68, 1
        %s147 = smul.addr %s146, 8
        %s148 = scalar_lea.vmem [#allocation5], %s147
        %v149 = vld [vmem:[%s130] sm:$0xff]
        %v150 = vmul.f32 %v149, %v149
        %vm151 = vcmask 261120
        %v152 = vsel %vm151, %v150, 0.0
        %153 = vadd.xlane.f32.xlu0 %v152
        %v154 = vpop.xlane.xlu0 %153
        %v155 = vmax.f32 %v154, 1e-24
        %v156 = vrsqrt.pop %v155
        %v157 = vmul.f32 %v156, 3.1622777
        %v158 = vmul.f32 %v149, %v157
        %159 = vst.msk [vmem:[%s148] sm:$0xff] %vm151, %v158
        %s160 = sand.u32 %s68, 1
        %s161 = scalar_lea.sflag [#allocation4], %s160
        %s162 = sand.u32 %s68, 1
        %s163 = smul.addr %s162, 8
        %s164 = scalar_lea.vmem [#allocation5], %s163
        // Predicated region
        $region29: #{tpu_custom_call.1} parent=23 // pred_check
          %p165 = pneg %p78
        $region30: #{tpu_custom_call.1} parent=23 // pred_check_branch
          %167 = sbr.rel (%p165) target = $region32
        $region31: #{tpu_custom_call.1} parent=23 // pred_region
          %s169 = ssub.s32 128, 128
          %170 = vsyncadd %s161, %s169
          %s171 = sadd.s32 %s23, %s22
          %s172 = smul.addr %s171, 128
          %s173 = scalar_lea.hbm %s1, %s172
          %s175 = sshll.u32 %s164, 4
          %s176 = int_to_ptr.vmem [resolvable:$true] %s175
          %178 = dma.vmem_to_hbm [thread:$0]  %s176, 128, %s173, %s161
        $region32: #{tpu_custom_call.1} parent=23 // pred_fallthru
          _
      $region24: #{tpu_custom_call.1} parent=5 // pred_fallthru
        _
      %p179 = scmp.le.s32.totalorder 2, %s13
      // Predicated region
      $region33: #{tpu_custom_call.1} parent=5 // pred_check
        %p180 = pneg %p179
      $region34: #{tpu_custom_call.1} parent=5 // pred_check_branch
        %182 = sbr.rel (%p180) target = $region36
      $region35: #{tpu_custom_call.1} parent=5 // pred_region
        %s183 = ssub.s32 %s13, 2
        // Predicated region
        $region37: #{tpu_custom_call.1} parent=35 // pred_check
          %p184 = pneg %p84
        $region38: #{tpu_custom_call.1} parent=35 // pred_check_branch
          %186 = sbr.rel (%p184) target = $region40
        $region39: #{tpu_custom_call.1} parent=35 // pred_region
          %s187 = sand.u32 %s69, 1
          %s188 = scalar_lea.sflag [#allocation4], %s187
          %s189 = sand.u32 %s69, 1
          %s190 = smul.addr %s189, 8
          %s191 = scalar_lea.vmem [#allocation5], %s190
          %192 = dma.done %s188, 128
        $region40: #{tpu_custom_call.1} parent=35 // pred_fallthru
          _
      $region36: #{tpu_custom_call.1} parent=5 // pred_fallthru
        _
    $region6: #{tpu_custom_call.1} parent=1 // loop_footer
      %s17 = sadd.s32 1, %s13
    $region7: #{tpu_custom_call.1} parent=1 // loop_footer_branch
      %12 = sbr.rel target = $region3
    $region8: #{tpu_custom_call.1} parent=1 // loop_exit
      _
    %193 = vsyncpa [#allocation3], 1
    %s194 = scalar_lea.sflag [#allocation3], 1
    %195 = vsyncpa %s194, 1
    %196 = vsyncpa [#allocation4], 1
    %s197 = scalar_lea.sflag [#allocation4], 1
    %198 = vsyncpa %s197, 1

</llo_original>
